<compile_context>
chip_gen: v6e
topology: v6e:2x2x1
jax: 0.10.0
libtpu: 0.0.40
codegen_flags: <defaults>
</compile_context>

<pallas_src>
import jax
import jax.numpy as jnp
from jax.experimental import pallas as pl
from jax.experimental.pallas import tpu as pltpu


def channel_attention_kernel(x_ref, w1_ref, b1_ref, w2_ref, b2_ref, o_ref):
    # x tile for this grid step: (Bt, C, L)
    x = x_ref[...]
    bt = x.shape[0]

    # --- Pools over the lane (last) axis, accumulated in f32 ------------------
    xf = x.astype(jnp.float32)
    avg = jnp.mean(xf, axis=-1)                               # (Bt, C)  C on lanes
    mx = jnp.max(xf, axis=-1)                                 # (Bt, C)
    # Stack along sublanes (no cross-lane shuffle): rows [0:Bt]=avg, [Bt:2Bt]=max.
    pooled = jnp.concatenate([avg, mx], axis=0)               # (2*Bt, C)

    # --- Shared MLP, batched over both pools and all Bt batch elements --------
    h = jnp.dot(pooled, w1_ref[...], preferred_element_type=jnp.float32)
    h = jnp.maximum(h + b1_ref[...], 0.0)                     # (2*Bt, H)
    y = jnp.dot(h, w2_ref[...], preferred_element_type=jnp.float32)
    y = y + b2_ref[...]                                       # (2*Bt, C)

    att = jax.nn.sigmoid(y[:bt] + y[bt:])                     # (Bt, C)

    # --- Apply: minimal per-element path (one multiply, one lane-dense store) -
    att_x = att.astype(x.dtype)[:, :, None]                   # (Bt, C, 1)
    o_ref[...] = (x * att_x).astype(o_ref.dtype)


def _pick_batch_tile(B, per_batch_bytes, target_tile_bytes, min_steps=2):
    """Largest divisor Bt of B with Bt*per_batch <= target while keeping >= min_steps
    grid steps when possible (megacore/v7x needs >=2 parallel steps)."""
    best = 1
    for bt in range(1, B + 1):
        if B % bt:
            continue
        if bt * per_batch_bytes > target_tile_bytes:
            break
        if (B // bt) >= min_steps or B < min_steps:
            best = bt
    return best


def channel_attention(x, w1, b1, w2, b2, *, target_tile_bytes=4 * 1024 * 1024):
    """x: (B, C, L); w1: (C, H); b1: (H,); w2: (H, C); b2: (C,).

    Weights are stored pre-transposed (in, out) so the kernel computes p @ W.
    x may be f32 or bf16; pooling/MLP run in f32, the apply keeps x's dtype.
    """
    B, C, L = x.shape
    H = w1.shape[1]
    itemsize = jnp.dtype(x.dtype).itemsize

    # TODO(synk): if L is not a multiple of 128, the store path falls back to
    # masked partial stores; pad L (with masked pooling) in the caller for real shapes.
    # TODO(synk): if one (1, C, L) slab exceeds the VMEM budget, add an inner
    # 'arbitrary' L-chunk axis with running sum/max scratch + a second apply pass.

    bt = _pick_batch_tile(B, C * L * itemsize, target_tile_bytes)
    tile_bytes = bt * C * L * itemsize

    w1f = w1.astype(jnp.float32)
    w2f = w2.astype(jnp.float32)
    b1_2d = b1.reshape(1, H).astype(jnp.float32)
    b2_2d = b2.reshape(1, C).astype(jnp.float32)
    weight_bytes = 4 * (w1f.size + b1_2d.size + w2f.size + b2_2d.size)

    # Input + output tiles are each double-buffered; cap budget at 48 MiB so the
    # same config is safe on v7x (64 MiB physical) as well as v5e/v6e (128 MiB).
    vmem_needed = 4 * tile_bytes + 2 * weight_bytes + (2 << 20)
    vmem_limit = int(min(max(vmem_needed, 16 << 20), 48 << 20))

    cost = pl.CostEstimate(
        flops=3 * B * C * L + 4 * B * (C * H + H * C),
        transcendentals=2 * B * C,
        bytes_accessed=2 * B * C * L * itemsize + weight_bytes,
    )

    return pl.pallas_call(
        channel_attention_kernel,
        out_shape=jax.ShapeDtypeStruct((B, C, L), x.dtype),
        grid=(B // bt,),
        in_specs=[
            pl.BlockSpec((bt, C, L), lambda i: (i, 0, 0)),   # x   (streamed tiles)
            pl.BlockSpec((C, H), lambda i: (0, 0)),          # w1  (resident)
            pl.BlockSpec((1, H), lambda i: (0, 0)),          # b1
            pl.BlockSpec((H, C), lambda i: (0, 0)),          # w2
            pl.BlockSpec((1, C), lambda i: (0, 0)),          # b2
        ],
        out_specs=pl.BlockSpec((bt, C, L), lambda i: (i, 0, 0)),
        compiler_params=pltpu.CompilerParams(
            dimension_semantics=("parallel",),
            vmem_limit_bytes=vmem_limit,
        ),
        cost_estimate=cost,
    )(x, w1f, b1_2d, w2f, b2_2d)


def channel_attention_ref(x, w1, b1, w2, b2):
    """Pure-JAX reference mirroring the PyTorch module."""
    def branch(p):
        h = jnp.maximum(p @ w1 + b1, 0.0)
        return h @ w2 + b2

    avg = jnp.mean(x, axis=-1)
    mx = jnp.max(x, axis=-1)
    att = jax.nn.sigmoid(branch(avg) + branch(mx))[..., None]
    return x * att


if __name__ == "__main__":
    # Small shapes consistent with the module: filters=32, ratio=4 -> hidden=8.
    # B=8 exercises the multi-batch tile path (Bt=4 -> 2 parallel grid steps).
    B, C, L = 8, 32, 128
    ratio = 4
    H = C // ratio

    key = jax.random.PRNGKey(0)
    kx, kw1, kb1, kw2, kb2 = jax.random.split(key, 5)

    x = jax.random.normal(kx, (B, C, L), dtype=jnp.float32)
    # PyTorch Linear weights are (out, in); stored pre-transposed as (in, out).
    w1 = jax.random.normal(kw1, (C, H), dtype=jnp.float32) * 0.1
    b1 = jax.random.normal(kb1, (H,), dtype=jnp.float32) * 0.1
    w2 = jax.random.normal(kw2, (H, C), dtype=jnp.float32) * 0.1
    b2 = jax.random.normal(kb2, (C,), dtype=jnp.float32) * 0.1

    out = jax.block_until_ready(channel_attention(x, w1, b1, w2, b2))
    ref = channel_attention_ref(x, w1, b1, w2, b2)

    assert out.shape == (B, C, L)
    assert jnp.allclose(out, ref, atol=1e-5, rtol=1e-5)

    print("KERNEL_OK")
</pallas_src>

<mosaic_0001>
module attributes {stable_mosaic.version = 11 : i64} {
  func.func @channel_attention_kernel(%arg0: i32, %arg1: memref<4x32x128xf32, #tpu.memory_space<vmem>>, %arg2: memref<32x8xf32, #tpu.memory_space<vmem>>, %arg3: memref<1x8xf32, #tpu.memory_space<vmem>>, %arg4: memref<8x32xf32, #tpu.memory_space<vmem>>, %arg5: memref<1x32xf32, #tpu.memory_space<vmem>>, %arg6: memref<4x32x128xf32, #tpu.memory_space<vmem>>) attributes {dimension_semantics = [#tpu.dimension_semantics<parallel>], iteration_bounds = array<i64: 2>, scalar_prefetch = 0 : i64, scratch_operands = 0 : i64, tpu.core_type = #tpu.core_type<tc>, window_params = [{transform_indices = @transform_0, window_bounds = array<i64: 4, 32, 128>}, {pipeline_mode = #tpu.pipeline_mode<synchronous>, transform_indices = @transform_1, window_bounds = array<i64: 32, 8>}, {pipeline_mode = #tpu.pipeline_mode<synchronous>, transform_indices = @transform_2, window_bounds = array<i64: 1, 8>}, {pipeline_mode = #tpu.pipeline_mode<synchronous>, transform_indices = @transform_3, window_bounds = array<i64: 8, 32>}, {pipeline_mode = #tpu.pipeline_mode<synchronous>, transform_indices = @transform_4, window_bounds = array<i64: 1, 32>}, {transform_indices = @transform_5, window_bounds = array<i64: 4, 32, 128>}]} {
    %c0 = arith.constant 0 : index
    %c0_0 = arith.constant 0 : index
    %c0_1 = arith.constant 0 : index
    %0 = vector.load %arg1[%c0, %c0_0, %c0_1] : memref<4x32x128xf32, #tpu.memory_space<vmem>>, vector<4x32x128xf32>
    %cst = arith.constant dense<0.000000e+00> : vector<4x32xf32>
    %1 = vector.multi_reduction <add>, %0, %cst [2] : vector<4x32x128xf32> to vector<4x32xf32>
    %cst_2 = arith.constant 1.280000e+02 : f32
    %2 = vector.broadcast %cst_2 : f32 to vector<4x32xf32>
    %3 = arith.divf %1, %2 : vector<4x32xf32>
    %cst_3 = arith.constant dense<0xFF800000> : vector<4x32xf32>
    %4 = vector.multi_reduction <maximumf>, %0, %cst_3 [2] : vector<4x32x128xf32> to vector<4x32xf32>
    %5 = tpu.concatenate %3, %4 in 0 : vector<4x32xf32>, vector<4x32xf32> -> vector<8x32xf32>
    %c0_4 = arith.constant 0 : index
    %c0_5 = arith.constant 0 : index
    %6 = vector.load %arg2[%c0_4, %c0_5] : memref<32x8xf32, #tpu.memory_space<vmem>>, vector<32x8xf32>
    %cst_6 = arith.constant dense<0.000000e+00> : vector<8x8xf32>
    %7 = tpu.matmul %5, %6, %cst_6 {dimension_numbers = #tpu.dot_dimension_numbers<[1], [0], [0], [1], [0, 0, 1, 1], [], []>} : vector<8x32xf32>, vector<32x8xf32>, vector<8x8xf32> -> vector<8x8xf32>
    %c0_7 = arith.constant 0 : index
    %c0_8 = arith.constant 0 : index
    %8 = vector.load %arg3[%c0_7, %c0_8] : memref<1x8xf32, #tpu.memory_space<vmem>>, vector<1x8xf32>
    %9 = vector.broadcast %8 : vector<1x8xf32> to vector<8x8xf32>
    %10 = arith.addf %7, %9 : vector<8x8xf32>
    %cst_9 = arith.constant 0.000000e+00 : f32
    %11 = vector.broadcast %cst_9 : f32 to vector<8x8xf32>
    %12 = arith.maximumf %10, %11 : vector<8x8xf32>
    %c0_10 = arith.constant 0 : index
    %c0_11 = arith.constant 0 : index
    %13 = vector.load %arg4[%c0_10, %c0_11] : memref<8x32xf32, #tpu.memory_space<vmem>>, vector<8x32xf32>
    %cst_12 = arith.constant dense<0.000000e+00> : vector<8x32xf32>
    %14 = tpu.matmul %12, %13, %cst_12 {dimension_numbers = #tpu.dot_dimension_numbers<[1], [0], [0], [1], [0, 0, 1, 1], [], []>} : vector<8x8xf32>, vector<8x32xf32>, vector<8x32xf32> -> vector<8x32xf32>
    %c0_13 = arith.constant 0 : index
    %c0_14 = arith.constant 0 : index
    %15 = vector.load %arg5[%c0_13, %c0_14] : memref<1x32xf32, #tpu.memory_space<vmem>>, vector<1x32xf32>
    %16 = vector.broadcast %15 : vector<1x32xf32> to vector<8x32xf32>
    %17 = arith.addf %14, %16 : vector<8x32xf32>
    %18 = vector.extract_strided_slice %17 {offsets = [0, 0], sizes = [4, 32], strides = [1, 1]} : vector<8x32xf32> to vector<4x32xf32>
    %19 = vector.extract_strided_slice %17 {offsets = [4, 0], sizes = [4, 32], strides = [1, 1]} : vector<8x32xf32> to vector<4x32xf32>
    %20 = arith.addf %18, %19 : vector<4x32xf32>
    %21 = arith.negf %20 : vector<4x32xf32>
    %22 = math.exp %21 : vector<4x32xf32>
    %cst_15 = arith.constant 1.000000e+00 : f32
    %23 = vector.broadcast %cst_15 : f32 to vector<4x32xf32>
    %24 = arith.addf %23, %22 : vector<4x32xf32>
    %25 = arith.divf %23, %24 : vector<4x32xf32>
    %26 = vector.shape_cast %25 : vector<4x32xf32> to vector<4x32x1xf32>
    %27 = vector.broadcast %26 : vector<4x32x1xf32> to vector<4x32x128xf32>
    %28 = arith.mulf %0, %27 : vector<4x32x128xf32>
    %c0_16 = arith.constant 0 : index
    %c0_17 = arith.constant 0 : index
    %c0_18 = arith.constant 0 : index
    %29 = vector.load %arg6[%c0_16, %c0_17, %c0_18] : memref<4x32x128xf32, #tpu.memory_space<vmem>>, vector<4x32x128xf32>
    tpu.vector_store %arg6[%c0_16, %c0_17, %c0_18], %28 {strides = array<i32>} : memref<4x32x128xf32, #tpu.memory_space<vmem>>, vector<4x32x128xf32>,
    return
  }
  func.func @transform_0(%arg0: i32) -> (i32, i32, i32) {
    %c0_i32 = arith.constant 0 : i32
    %c0_i32_0 = arith.constant 0 : i32
    %c0_i32_1 = arith.constant 0 : i32
    return %arg0, %c0_i32, %c0_i32_0 : i32, i32, i32
  }
  func.func @transform_1(%arg0: i32) -> (i32, i32) {
    %c0_i32 = arith.constant 0 : i32
    %c0_i32_0 = arith.constant 0 : i32
    %c0_i32_1 = arith.constant 0 : i32
    return %c0_i32, %c0_i32_0 : i32, i32
  }
  func.func @transform_2(%arg0: i32) -> (i32, i32) {
    %c0_i32 = arith.constant 0 : i32
    %c0_i32_0 = arith.constant 0 : i32
    %c0_i32_1 = arith.constant 0 : i32
    return %c0_i32, %c0_i32_0 : i32, i32
  }
  func.func @transform_3(%arg0: i32) -> (i32, i32) {
    %c0_i32 = arith.constant 0 : i32
    %c0_i32_0 = arith.constant 0 : i32
    %c0_i32_1 = arith.constant 0 : i32
    return %c0_i32, %c0_i32_0 : i32, i32
  }
  func.func @transform_4(%arg0: i32) -> (i32, i32) {
    %c0_i32 = arith.constant 0 : i32
    %c0_i32_0 = arith.constant 0 : i32
    %c0_i32_1 = arith.constant 0 : i32
    return %c0_i32, %c0_i32_0 : i32, i32
  }
  func.func @transform_5(%arg0: i32) -> (i32, i32, i32) {
    %c0_i32 = arith.constant 0 : i32
    %c0_i32_0 = arith.constant 0 : i32
    %c0_i32_1 = arith.constant 0 : i32
    return %arg0, %c0_i32, %c0_i32_0 : i32, i32, i32
  }
}

</mosaic_0001>

<llo_original>
// kernel: tpu_custom_call.1
$region0: #{tpu_custom_call.1}
  #allocation0 [shape = 'u32[]', space=smem, size = 0x4, offset = 0x4, fixed_abs, tag = 'smem constant byte address 0x4 - core index']
  #allocation1 [shape = 'u32[144,128]{1,0:T(1,128)}', space=vmem, size = 0x12000, scoped, tag = 'internal scratch']
  %s0 = inlined_call_operand.hbm [shape: f32[8,32,128], index: 0, kind: input, shape index: {}]
  %s1 = inlined_call_operand.vmem [shape: f32[32,8], index: 1, kind: input, shape index: {}]
  %s2 = inlined_call_operand.vmem [shape: f32[1,8], index: 2, kind: input, shape index: {}]
  %s3 = inlined_call_operand.vmem [shape: f32[8,32], index: 3, kind: input, shape index: {}]
  %s4 = inlined_call_operand.vmem [shape: f32[1,32], index: 4, kind: input, shape index: {}]
  %s5 = inlined_call_operand.hbm [shape: f32[8,32,128], index: 5, kind: output, shape index: {}]
  %s6 = sld [smem:[#allocation0]]
  $region57: #{tpu_custom_call.1} parent=0
    _
  %s8 = ssub.s32 1, %s6
  %s9 = scalar_select 0, %s8, %s6
  $region1: #{tpu_custom_call.1} parent=0
    #allocation2 [shape = 'u8[131072]{0}', space=vmem, size = 0x20000, scoped, tag = 'input window, operand 0']
    #allocation3 [shape = 's32[2]{0}', space=sflag, size = 0x8, scoped, tag = 'scoped memory for tpu_custom_call.1']
    #allocation4 [shape = 's32[2]{0}', space=sflag, size = 0x8, scoped, tag = 'scoped memory for tpu_custom_call.1']
    #allocation5 [shape = 'u8[131072]{0}', space=vmem, size = 0x20000, scoped, tag = 'output window, operand 0']
    %10 = vsyncpa [#allocation3], 0
    %s11 = scalar_lea.sflag [#allocation3], 1
    %12 = vsyncpa %s11, 0
    %13 = vsyncpa [#allocation4], 0
    %s14 = scalar_lea.sflag [#allocation4], 1
    %15 = vsyncpa %s14, 0
    loop: start=0, step=1, limit=4
    $region2: #{tpu_custom_call.1} parent=1 // loop_pre_header
      _
    $region3: #{tpu_custom_call.1} parent=1 // loop_header
      %s17 = sphi 0, %s21
      %p18 = scmp.ge.s32.totalorder %s17, 4
      %s27 = sphi 0, %s29
      %s30 = sphi 0, %s27
      %s31 = sphi 0, %s30
      %s47 = sphi 0, %s31
      %s51 = sphi 0, %s51
      %s53 = sphi 0, %s51
      %s54 = sphi 0, %s53
      %s68 = sphi 0, %s54
      %s72 = sphi 0, %s72
      %s74 = sphi 0, %s72
      %s75 = sphi 0, %s74
      %s89 = sphi 0, %s75
      %s93 = sphi 0, %s93
      %s95 = sphi 0, %s93
      %s96 = sphi 0, %s95
      %s110 = sphi 0, %s96
      %s114 = sphi 0, %s114
      %s116 = sphi 0, %s114
      %s117 = sphi 0, %s116
      %s131 = sphi 0, %s117
      %s137 = sphi 0, %s139
      %s140 = sphi 0, %s137
      %s141 = sphi 0, %s140
      %s157 = sphi 0, %s141
    $region4: #{tpu_custom_call.1} parent=1 // loop_header_branch
      %20 = sbr.rel (%p18) target = $region8
    $region5: #{tpu_custom_call.1} parent=1 // loop_body
      %s22 = ssub.s32 %s17, 1
      %s23 = ssub.s32 %s17, 2
      %s24 = sadd.s32 %s17, 1
      %s25 = ssub.s32 %s17, %s24
      %p26 = scmp.eq.s32.totalorder %s25, 0
      %s28 = sadd.s32 %s27, 1
      %s29 = scalar_select %p26, %s27, %s28
      %p32 = pneg %p26
      %p33 = scmp.eq.s32.totalorder %s17, 1
      %p34 = por %p32, %p33
      %p35 = scmp.ne.s32.totalorder %s27, %s30
      %p36 = scmp.eq.s32.totalorder %s17, 0
      %p37 = por %p35, %p36
      %p38 = scmp.ne.s32.totalorder %s27, %s30
      %p39 = scmp.eq.s32.totalorder %s22, 1
      %p40 = por %p38, %p39
      %p41 = scmp.ne.s32.totalorder %s30, %s31
      %p42 = scmp.eq.s32.totalorder %s22, 0
      %p43 = por %p41, %p42
      %p44 = scmp.ne.s32.totalorder %s30, %s31
      %p45 = scmp.eq.s32.totalorder %s23, 1
      %p46 = por %p44, %p45
      %p48 = scmp.ne.s32.totalorder %s31, %s47
      %p49 = scmp.eq.s32.totalorder %s23, 0
      %p50 = por %p48, %p49
      %s52 = sadd.s32 %s51, 1
      %p55 = scmp.eq.s32.totalorder %s17, 1
      %p56 = scmp.ne.s32.totalorder %s51, %s53
      %p57 = scmp.eq.s32.totalorder %s17, 0
      %p58 = por %p56, %p57
      %p59 = scmp.ne.s32.totalorder %s51, %s53
      %p60 = scmp.eq.s32.totalorder %s22, 1
      %p61 = por %p59, %p60
      %p62 = scmp.ne.s32.totalorder %s53, %s54
      %p63 = scmp.eq.s32.totalorder %s22, 0
      %p64 = por %p62, %p63
      %p65 = scmp.ne.s32.totalorder %s53, %s54
      %p66 = scmp.eq.s32.totalorder %s23, 1
      %p67 = por %p65, %p66
      %p69 = scmp.ne.s32.totalorder %s54, %s68
      %p70 = scmp.eq.s32.totalorder %s23, 0
      %p71 = por %p69, %p70
      %s73 = sadd.s32 %s72, 1
      %p76 = scmp.eq.s32.totalorder %s17, 1
      %p77 = scmp.ne.s32.totalorder %s72, %s74
      %p78 = scmp.eq.s32.totalorder %s17, 0
      %p79 = por %p77, %p78
      %p80 = scmp.ne.s32.totalorder %s72, %s74
      %p81 = scmp.eq.s32.totalorder %s22, 1
      %p82 = por %p80, %p81
      %p83 = scmp.ne.s32.totalorder %s74, %s75
      %p84 = scmp.eq.s32.totalorder %s22, 0
      %p85 = por %p83, %p84
      %p86 = scmp.ne.s32.totalorder %s74, %s75
      %p87 = scmp.eq.s32.totalorder %s23, 1
      %p88 = por %p86, %p87
      %p90 = scmp.ne.s32.totalorder %s75, %s89
      %p91 = scmp.eq.s32.totalorder %s23, 0
      %p92 = por %p90, %p91
      %s94 = sadd.s32 %s93, 1
      %p97 = scmp.eq.s32.totalorder %s17, 1
      %p98 = scmp.ne.s32.totalorder %s93, %s95
      %p99 = scmp.eq.s32.totalorder %s17, 0
      %p100 = por %p98, %p99
      %p101 = scmp.ne.s32.totalorder %s93, %s95
      %p102 = scmp.eq.s32.totalorder %s22, 1
      %p103 = por %p101, %p102
      %p104 = scmp.ne.s32.totalorder %s95, %s96
      %p105 = scmp.eq.s32.totalorder %s22, 0
      %p106 = por %p104, %p105
      %p107 = scmp.ne.s32.totalorder %s95, %s96
      %p108 = scmp.eq.s32.totalorder %s23, 1
      %p109 = por %p107, %p108
      %p111 = scmp.ne.s32.totalorder %s96, %s110
      %p112 = scmp.eq.s32.totalorder %s23, 0
      %p113 = por %p111, %p112
      %s115 = sadd.s32 %s114, 1
      %p118 = scmp.eq.s32.totalorder %s17, 1
      %p119 = scmp.ne.s32.totalorder %s114, %s116
      %p120 = scmp.eq.s32.totalorder %s17, 0
      %p121 = por %p119, %p120
      %p122 = scmp.ne.s32.totalorder %s114, %s116
      %p123 = scmp.eq.s32.totalorder %s22, 1
      %p124 = por %p122, %p123
      %p125 = scmp.ne.s32.totalorder %s116, %s117
      %p126 = scmp.eq.s32.totalorder %s22, 0
      %p127 = por %p125, %p126
      %p128 = scmp.ne.s32.totalorder %s116, %s117
      %p129 = scmp.eq.s32.totalorder %s23, 1
      %p130 = por %p128, %p129
      %p132 = scmp.ne.s32.totalorder %s117, %s131
      %p133 = scmp.eq.s32.totalorder %s23, 0
      %p134 = por %p132, %p133
      %s135 = ssub.s32 %s17, %s24
      %p136 = scmp.eq.s32.totalorder %s135, 0
      %s138 = sadd.s32 %s137, 1
      %s139 = scalar_select %p136, %s137, %s138
      %p142 = pneg %p136
      %p143 = scmp.eq.s32.totalorder %s17, 1
      %p144 = por %p142, %p143
      %p145 = scmp.ne.s32.totalorder %s137, %s140
      %p146 = scmp.eq.s32.totalorder %s17, 0
      %p147 = por %p145, %p146
      %p148 = scmp.ne.s32.totalorder %s137, %s140
      %p149 = scmp.eq.s32.totalorder %s22, 1
      %p150 = por %p148, %p149
      %p151 = scmp.ne.s32.totalorder %s140, %s141
      %p152 = scmp.eq.s32.totalorder %s22, 0
      %p153 = por %p151, %p152
      %p154 = scmp.ne.s32.totalorder %s140, %s141
      %p155 = scmp.eq.s32.totalorder %s23, 1
      %p156 = por %p154, %p155
      %p158 = scmp.ne.s32.totalorder %s141, %s157
      %p159 = scmp.eq.s32.totalorder %s23, 0
      %p160 = por %p158, %p159
      %p161 = scmp.le.s32.totalorder 1, %s17
      %p162 = scmp.lt.s32.totalorder %s17, 3
      %p163 = pnand %p161, %p162
      %p164 = pneg %p163
      // Predicated region
      $region9: #{tpu_custom_call.1} parent=5 // pred_check
        _
      $region10: #{tpu_custom_call.1} parent=5 // pred_check_branch
        %166 = sbr.rel (%p163) target = $region12
      $region11: #{tpu_custom_call.1} parent=5 // pred_region
        %s167 = ssub.s32 %s17, 1
        // Predicated region
        $region13: #{tpu_custom_call.1} parent=11 // pred_check
          %p168 = pneg %p64
        $region14: #{tpu_custom_call.1} parent=11 // pred_check_branch
          %170 = sbr.rel (%p168) target = $region16
        $region15: #{tpu_custom_call.1} parent=11 // pred_region
          _
        $region16: #{tpu_custom_call.1} parent=11 // pred_fallthru
          _
        // Predicated region
        $region17: #{tpu_custom_call.1} parent=11 // pred_check
          %p171 = pneg %p85
        $region18: #{tpu_custom_call.1} parent=11 // pred_check_branch
          %173 = sbr.rel (%p171) target = $region20
        $region19: #{tpu_custom_call.1} parent=11 // pred_region
          _
        $region20: #{tpu_custom_call.1} parent=11 // pred_fallthru
          _
        // Predicated region
        $region21: #{tpu_custom_call.1} parent=11 // pred_check
          %p174 = pneg %p106
        $region22: #{tpu_custom_call.1} parent=11 // pred_check_branch
          %176 = sbr.rel (%p174) target = $region24
        $region23: #{tpu_custom_call.1} parent=11 // pred_region
          _
        $region24: #{tpu_custom_call.1} parent=11 // pred_fallthru
          _
        // Predicated region
        $region25: #{tpu_custom_call.1} parent=11 // pred_check
          %p177 = pneg %p127
        $region26: #{tpu_custom_call.1} parent=11 // pred_check_branch
          %179 = sbr.rel (%p177) target = $region28
        $region27: #{tpu_custom_call.1} parent=11 // pred_region
          _
        $region28: #{tpu_custom_call.1} parent=11 // pred_fallthru
          _
      $region12: #{tpu_custom_call.1} parent=5 // pred_fallthru
        _
      %p180 = scmp.lt.s32.totalorder %s17, 2
      // Predicated region
      $region29: #{tpu_custom_call.1} parent=5 // pred_check
        %p181 = pneg %p180
      $region30: #{tpu_custom_call.1} parent=5 // pred_check_branch
        %183 = sbr.rel (%p181) target = $region32
      $region31: #{tpu_custom_call.1} parent=5 // pred_region
        // Predicated region
        $region33: #{tpu_custom_call.1} parent=31 // pred_check
          %p184 = pneg %p37
        $region34: #{tpu_custom_call.1} parent=31 // pred_check_branch
          %186 = sbr.rel (%p184) target = $region36
        $region35: #{tpu_custom_call.1} parent=31 // pred_region
          %s187 = sand.u32 %s27, 1
          %s188 = scalar_lea.sflag [#allocation3], %s187
          %s189 = sand.u32 %s27, 1
          %s190 = smul.addr %s189, 128
          %s191 = scalar_lea.vmem [#allocation2], %s190
          %s192 = smul.u32 4, %s17
          %s194 = ssub.s32 2048, 2048
          %195 = vsyncadd %s188, %s194
          %s196 = smul.addr %s192, 4
          %s197 = smul.addr %s196, 128
          %s198 = scalar_lea.hbm %s0, %s197
          %s199 = sshll.u32 %s191, 4
          %s200 = int_to_ptr.vmem [resolvable:$true] %s199
          %205 = dma.hbm_to_vmem [thread:$0]  %s198, 2048, %s200, %s188, 128, 128, 8
        $region36: #{tpu_custom_call.1} parent=31 // pred_fallthru
          _
      $region32: #{tpu_custom_call.1} parent=5 // pred_fallthru
        _
      %p206 = scmp.le.s32.totalorder 1, %s17
      %p207 = scmp.lt.s32.totalorder %s17, 3
      %p208 = pnand %p206, %p207
      %p209 = pneg %p208
      // Predicated region
      $region37: #{tpu_custom_call.1} parent=5 // pred_check
        _
      $region38: #{tpu_custom_call.1} parent=5 // pred_check_branch
        %211 = sbr.rel (%p208) target = $region40
      $region39: #{tpu_custom_call.1} parent=5 // pred_region
        %s212 = ssub.s32 %s17, 1
        %s213 = sand.u32 %s30, 1
        %s214 = scalar_lea.sflag [#allocation3], %s213
        %s215 = sand.u32 %s30, 1
        %s216 = smul.addr %s215, 128
        %s217 = scalar_lea.vmem [#allocation2], %s216
        // Predicated region
        $region41: #{tpu_custom_call.1} parent=39 // pred_check
          %p218 = pneg %p43
        $region42: #{tpu_custom_call.1} parent=39 // pred_check_branch
          %220 = sbr.rel (%p218) target = $region44
        $region43: #{tpu_custom_call.1} parent=39 // pred_region
          %221 = dma.done %s214, 2048
        $region44: #{tpu_custom_call.1} parent=39 // pred_fallthru
          _
        %s222 = sand.u32 %s30, 1
        %s223 = scalar_lea.sflag [#allocation3], %s222
        %s224 = sand.u32 %s30, 1
        %s225 = smul.addr %s224, 128
        %s226 = scalar_lea.vmem [#allocation2], %s225
        %p227 = pneg %p43
        %p228 = pneg %p40
        %p229 = pneg %p64
        %p230 = pneg %p61
        %p231 = pneg %p85
        %p232 = pneg %p82
        %p233 = pneg %p106
        %p234 = pneg %p103
        %p235 = pneg %p127
        %p236 = pneg %p124
        %p237 = pneg %p153
        %p238 = pneg %p150
        %s239 = sand.u32 %s140, 1
        %s240 = scalar_lea.sflag [#allocation4], %s239
        %s241 = sand.u32 %s140, 1
        %s242 = smul.addr %s241, 128
        %s243 = scalar_lea.vmem [#allocation5], %s242
        %s244 = smul.u32 4, %s22
        %s245 = smul.u32 4, %s22
        %v246 = vld [vmem:[%s217] sm:$0xff]
        %v247 = vld [vmem:[%s217 + $0x8] sm:$0xff]
        %v248 = vld [vmem:[%s217 + $0x10] sm:$0xff]
        %v249 = vld [vmem:[%s217 + $0x18] sm:$0xff]
        %v250 = vld [vmem:[%s217 + $0x20] sm:$0xff]
        %v251 = vld [vmem:[%s217 + $0x28] sm:$0xff]
        %v252 = vld [vmem:[%s217 + $0x30] sm:$0xff]
        %v253 = vld [vmem:[%s217 + $0x38] sm:$0xff]
        %v254 = vld [vmem:[%s217 + $0x40] sm:$0xff]
        %v255 = vld [vmem:[%s217 + $0x48] sm:$0xff]
        %v256 = vld [vmem:[%s217 + $0x50] sm:$0xff]
        %v257 = vld [vmem:[%s217 + $0x58] sm:$0xff]
        %v258 = vld [vmem:[%s217 + $0x60] sm:$0xff]
        %v259 = vld [vmem:[%s217 + $0x68] sm:$0xff]
        %v260 = vld [vmem:[%s217 + $0x70] sm:$0xff]
        %v261 = vld [vmem:[%s217 + $0x78] sm:$0xff]
        %262 = vadd.xlane.f32.xlu0 %v246
        %v263 = vpop.xlane.xlu0 %262
        %264 = vadd.xlane.f32.xlu0 %v247
        %v265 = vpop.xlane.xlu0 %264
        %266 = vadd.xlane.f32.xlu0 %v248
        %v267 = vpop.xlane.xlu0 %266
        %268 = vadd.xlane.f32.xlu0 %v249
        %v269 = vpop.xlane.xlu0 %268
        %270 = vadd.xlane.f32.xlu0 %v250
        %v271 = vpop.xlane.xlu0 %270
        %272 = vadd.xlane.f32.xlu0 %v251
        %v273 = vpop.xlane.xlu0 %272
        %274 = vadd.xlane.f32.xlu0 %v252
        %v275 = vpop.xlane.xlu0 %274
        %276 = vadd.xlane.f32.xlu0 %v253
        %v277 = vpop.xlane.xlu0 %276
        %278 = vadd.xlane.f32.xlu0 %v254
        %v279 = vpop.xlane.xlu0 %278
        %280 = vadd.xlane.f32.xlu0 %v255
        %v281 = vpop.xlane.xlu0 %280
        %282 = vadd.xlane.f32.xlu0 %v256
        %v283 = vpop.xlane.xlu0 %282
        %284 = vadd.xlane.f32.xlu0 %v257
        %v285 = vpop.xlane.xlu0 %284
        %286 = vadd.xlane.f32.xlu0 %v258
        %v287 = vpop.xlane.xlu0 %286
        %288 = vadd.xlane.f32.xlu0 %v259
        %v289 = vpop.xlane.xlu0 %288
        %290 = vadd.xlane.f32.xlu0 %v260
        %v291 = vpop.xlane.xlu0 %290
        %292 = vadd.xlane.f32.xlu0 %v261
        %v293 = vpop.xlane.xlu0 %292
        %v294 = vrcp.pop 128.0
        %v295 = vmul.f32 %v263, %v294
        %v296 = vmul.f32 %v265, %v294
        %v297 = vmul.f32 %v267, %v294
        %v298 = vmul.f32 %v269, %v294
        %v299 = vmul.f32 %v271, %v294
        %v300 = vmul.f32 %v273, %v294
        %v301 = vmul.f32 %v275, %v294
        %v302 = vmul.f32 %v277, %v294
        %v303 = vmul.f32 %v279, %v294
        %v304 = vmul.f32 %v281, %v294
        %v305 = vmul.f32 %v283, %v294
        %v306 = vmul.f32 %v285, %v294
        %v307 = vmul.f32 %v287, %v294
        %v308 = vmul.f32 %v289, %v294
        %v309 = vmul.f32 %v291, %v294
        %v310 = vmul.f32 %v293, %v294
        %311 = vmax.xlane.f32.xlu0 %v246
        %v312 = vpop.xlane.xlu0 %311
        %313 = vmax.xlane.f32.xlu0 %v247
        %v314 = vpop.xlane.xlu0 %313
        %315 = vmax.xlane.f32.xlu0 %v248
        %v316 = vpop.xlane.xlu0 %315
        %317 = vmax.xlane.f32.xlu0 %v249
        %v318 = vpop.xlane.xlu0 %317
        %319 = vmax.xlane.f32.xlu0 %v250
        %v320 = vpop.xlane.xlu0 %319
        %321 = vmax.xlane.f32.xlu0 %v251
        %v322 = vpop.xlane.xlu0 %321
        %323 = vmax.xlane.f32.xlu0 %v252
        %v324 = vpop.xlane.xlu0 %323
        %325 = vmax.xlane.f32.xlu0 %v253
        %v326 = vpop.xlane.xlu0 %325
        %327 = vmax.xlane.f32.xlu0 %v254
        %v328 = vpop.xlane.xlu0 %327
        %329 = vmax.xlane.f32.xlu0 %v255
        %v330 = vpop.xlane.xlu0 %329
        %331 = vmax.xlane.f32.xlu0 %v256
        %v332 = vpop.xlane.xlu0 %331
        %333 = vmax.xlane.f32.xlu0 %v257
        %v334 = vpop.xlane.xlu0 %333
        %335 = vmax.xlane.f32.xlu0 %v258
        %v336 = vpop.xlane.xlu0 %335
        %337 = vmax.xlane.f32.xlu0 %v259
        %v338 = vpop.xlane.xlu0 %337
        %339 = vmax.xlane.f32.xlu0 %v260
        %v340 = vpop.xlane.xlu0 %339
        %341 = vmax.xlane.f32.xlu0 %v261
        %v342 = vpop.xlane.xlu0 %341
        %v359 = vlaneseq
        %v360 = vand.u32 %v359, 127
        %v361 = vlaneseq
        %v362 = vshrl.u32 %v361, 7
        %v363 = vsub.s32 %v360, %v362
        %v364 = vrot.slane %v295, %v363
        %v365 = vadd.s32 %v360, 4294967288
        %v366 = vlaneseq
        %v367 = vshrl.u32 %v366, 7
        %v368 = vsub.s32 %v365, %v367
        %v369 = vrot.slane %v296, %v368
        %vm370 = vcmask 130112
        %v371 = vsel %vm370, %v369, %v364
        %v372 = vadd.s32 %v360, 4294967280
        %v373 = vlaneseq
        %v374 = vshrl.u32 %v373, 7
        %v375 = vsub.s32 %v372, %v374
        %v376 = vrot.slane %v297, %v375
        %vm377 = vcmask 195712
        %v378 = vsel %vm377, %v376, %v371
        %v379 = vadd.s32 %v360, 4294967272
        %v380 = vlaneseq
        %v381 = vshrl.u32 %v380, 7
        %v382 = vsub.s32 %v379, %v381
        %v383 = vrot.slane %v298, %v382
        %vm384 = vcmask 261312
        %v385 = vsel %vm384, %v383, %v378
        %v386 = vlaneseq
        %v387 = vshrl.u32 %v386, 7
        %v388 = vsub.s32 %v360, %v387
        %v389 = vrot.slane %v299, %v388
        %v390 = vlaneseq
        %v391 = vshrl.u32 %v390, 7
        %v392 = vsub.s32 %v365, %v391
        %v393 = vrot.slane %v300, %v392
        %v394 = vsel %vm370, %v393, %v389
        %v395 = vlaneseq
        %v396 = vshrl.u32 %v395, 7
        %v397 = vsub.s32 %v372, %v396
        %v398 = vrot.slane %v301, %v397
        %v399 = vsel %vm377, %v398, %v394
        %v400 = vlaneseq
        %v401 = vshrl.u32 %v400, 7
        %v402 = vsub.s32 %v379, %v401
        %v403 = vrot.slane %v302, %v402
        %v404 = vsel %vm384, %v403, %v399
        %v405 = vlaneseq
        %v406 = vshrl.u32 %v405, 7
        %v407 = vsub.s32 %v360, %v406
        %v408 = vrot.slane %v303, %v407
        %v409 = vlaneseq
        %v410 = vshrl.u32 %v409, 7
        %v411 = vsub.s32 %v365, %v410
        %v412 = vrot.slane %v304, %v411
        %v413 = vsel %vm370, %v412, %v408
        %v414 = vlaneseq
        %v415 = vshrl.u32 %v414, 7
        %v416 = vsub.s32 %v372, %v415
        %v417 = vrot.slane %v305, %v416
        %v418 = vsel %vm377, %v417, %v413
        %v419 = vlaneseq
        %v420 = vshrl.u32 %v419, 7
        %v421 = vsub.s32 %v379, %v420
        %v422 = vrot.slane %v306, %v421
        %v423 = vsel %vm384, %v422, %v418
        %v424 = vlaneseq
        %v425 = vshrl.u32 %v424, 7
        %v426 = vsub.s32 %v360, %v425
        %v427 = vrot.slane %v307, %v426
        %v428 = vlaneseq
        %v429 = vshrl.u32 %v428, 7
        %v430 = vsub.s32 %v365, %v429
        %v431 = vrot.slane %v308, %v430
        %v432 = vsel %vm370, %v431, %v427
        %v433 = vlaneseq
        %v434 = vshrl.u32 %v433, 7
        %v435 = vsub.s32 %v372, %v434
        %v436 = vrot.slane %v309, %v435
        %v437 = vsel %vm377, %v436, %v432
        %v438 = vlaneseq
        %v439 = vshrl.u32 %v438, 7
        %v440 = vsub.s32 %v379, %v439
        %v441 = vrot.slane %v310, %v440
        %v442 = vsel %vm384, %v441, %v437
        %vm443 = vcmask 1041409
        %v444 = vsel %vm443, %v404, %v385
        %vm445 = vcmask 1042434
        %v446 = vsel %vm445, %v423, %v444
        %vm447 = vcmask 1043459
        %v448 = vsel %vm447, %v442, %v446
        %v466 = vlaneseq
        %v467 = vshrl.u32 %v466, 7
        %v468 = vsub.s32 %v360, %v467
        %v469 = vrot.slane %v312, %v468
        %v470 = vlaneseq
        %v471 = vshrl.u32 %v470, 7
        %v472 = vsub.s32 %v365, %v471
        %v473 = vrot.slane %v314, %v472
        %v474 = vsel %vm370, %v473, %v469
        %v475 = vlaneseq
        %v476 = vshrl.u32 %v475, 7
        %v477 = vsub.s32 %v372, %v476
        %v478 = vrot.slane %v316, %v477
        %v479 = vsel %vm377, %v478, %v474
        %v480 = vlaneseq
        %v481 = vshrl.u32 %v480, 7
        %v482 = vsub.s32 %v379, %v481
        %v483 = vrot.slane %v318, %v482
        %v484 = vsel %vm384, %v483, %v479
        %v485 = vlaneseq
        %v486 = vshrl.u32 %v485, 7
        %v487 = vsub.s32 %v360, %v486
        %v488 = vrot.slane %v320, %v487
        %v489 = vlaneseq
        %v490 = vshrl.u32 %v489, 7
        %v491 = vsub.s32 %v365, %v490
        %v492 = vrot.slane %v322, %v491
        %v493 = vsel %vm370, %v492, %v488
        %v494 = vlaneseq
        %v495 = vshrl.u32 %v494, 7
        %v496 = vsub.s32 %v372, %v495
        %v497 = vrot.slane %v324, %v496
        %v498 = vsel %vm377, %v497, %v493
        %v499 = vlaneseq
        %v500 = vshrl.u32 %v499, 7
        %v501 = vsub.s32 %v379, %v500
        %v502 = vrot.slane %v326, %v501
        %v503 = vsel %vm384, %v502, %v498
        %v504 = vlaneseq
        %v505 = vshrl.u32 %v504, 7
        %v506 = vsub.s32 %v360, %v505
        %v507 = vrot.slane %v328, %v506
        %v508 = vlaneseq
        %v509 = vshrl.u32 %v508, 7
        %v510 = vsub.s32 %v365, %v509
        %v511 = vrot.slane %v330, %v510
        %v512 = vsel %vm370, %v511, %v507
        %v513 = vlaneseq
        %v514 = vshrl.u32 %v513, 7
        %v515 = vsub.s32 %v372, %v514
        %v516 = vrot.slane %v332, %v515
        %v517 = vsel %vm377, %v516, %v512
        %v518 = vlaneseq
        %v519 = vshrl.u32 %v518, 7
        %v520 = vsub.s32 %v379, %v519
        %v521 = vrot.slane %v334, %v520
        %v522 = vsel %vm384, %v521, %v517
        %v523 = vlaneseq
        %v524 = vshrl.u32 %v523, 7
        %v525 = vsub.s32 %v360, %v524
        %v526 = vrot.slane %v336, %v525
        %v527 = vlaneseq
        %v528 = vshrl.u32 %v527, 7
        %v529 = vsub.s32 %v365, %v528
        %v530 = vrot.slane %v338, %v529
        %v531 = vsel %vm370, %v530, %v526
        %v532 = vlaneseq
        %v533 = vshrl.u32 %v532, 7
        %v534 = vsub.s32 %v372, %v533
        %v535 = vrot.slane %v340, %v534
        %v536 = vsel %vm377, %v535, %v531
        %v537 = vlaneseq
        %v538 = vshrl.u32 %v537, 7
        %v539 = vsub.s32 %v379, %v538
        %v540 = vrot.slane %v342, %v539
        %v541 = vsel %vm384, %v540, %v536
        %vm542 = vcmask 1045509
        %v543 = vsel %vm542, %v503, %v484
        %vm544 = vcmask 1046534
        %v545 = vsel %vm544, %v522, %v543
        %vm546 = vcmask 1047559
        %v547 = vsel %vm546, %v541, %v545
        %vm549 = vcmask 1043456
        %v550 = vsel %vm549, %v448, %v547
        %v551 = vld [vmem:[%s1] sm:$0xff]
        %v552 = vld [vmem:[%s1 + $0x8] sm:$0xff]
        %v553 = vld [vmem:[%s1 + $0x10] sm:$0xff]
        %v554 = vld [vmem:[%s1 + $0x18] sm:$0xff]
        %v555 = vld [vmem:[%s2] sm:$0x1]
        %v557 = vlaneseq
        %v558 = vshrl.u32 %v557, 7
        %v559 = vsub.s32 0, %v558
        %v560 = vrot.slane %v555, %v559
        %vm562 = vcmask 261120
        %v564 = vsel %vm562, %v550, 0
        %566 = vmatprep.subr.mxu0 0.0
        %567 = vmatpush1.msra.mxu0 0.0
        %568 = vmatprep.subr.mxu0 0.0
        %569 = vmatpush1.msra.mxu0 0.0
        %570 = vmatprep.subr.mxu0 0.0
        %571 = vmatpush1.msra.mxu0 0.0
        %572 = vmatprep.subr.mxu0 0.0
        %573 = vmatpush1.msra.mxu0 0.0
        %574 = vmatprep.subr.mxu0 0.0
        %575 = vmatpush1.msra.mxu0 0.0
        %576 = vmatprep.subr.mxu0 0.0
        %577 = vmatpush1.msra.mxu0 0.0
        %578 = vmatprep.subr.mxu0 0.0
        %579 = vmatpush1.msra.mxu0 0.0
        %580 = vmatprep.subr.mxu0 0.0
        %581 = vmatpush1.msra.mxu0 0.0
        %582 = vmatprep.subr.mxu0 0.0
        %583 = vmatpush1.msra.mxu0 0.0
        %584 = vmatprep.subr.mxu0 0.0
        %585 = vmatpush1.msra.mxu0 0.0
        %586 = vmatprep.subr.mxu0 0.0
        %587 = vmatpush1.msra.mxu0 0.0
        %588 = vmatprep.subr.mxu0 0.0
        %589 = vmatpush1.msra.mxu0 0.0
        %590 = vmatprep.subr.mxu0 0.0
        %591 = vmatpush1.msra.mxu0 %v554
        %592 = vmatprep.subr.mxu0 0.0
        %593 = vmatpush1.msra.mxu0 %v553
        %594 = vmatprep.subr.mxu0 0.0
        %595 = vmatpush1.msra.mxu0 %v552
        %596 = vmatprep.subr.mxu0 0.0
        %597 = vmatpush1.msra.mxu0 %v551
        %598 = vmatprep.subr.mxu0 0.0
        %599 = vmatpush2.msra.mxu0 0.0
        %600 = vmatprep.subr.mxu0 0.0
        %601 = vmatpush2.msra.mxu0 0.0
        %602 = vmatprep.subr.mxu0 0.0
        %603 = vmatpush2.msra.mxu0 0.0
        %604 = vmatprep.subr.mxu0 0.0
        %605 = vmatpush2.msra.mxu0 0.0
        %606 = vmatprep.subr.mxu0 0.0
        %607 = vmatpush2.msra.mxu0 0.0
        %608 = vmatprep.subr.mxu0 0.0
        %609 = vmatpush2.msra.mxu0 0.0
        %610 = vmatprep.subr.mxu0 0.0
        %611 = vmatpush2.msra.mxu0 0.0
        %612 = vmatprep.subr.mxu0 0.0
        %613 = vmatpush2.msra.mxu0 0.0
        %614 = vmatprep.subr.mxu0 0.0
        %615 = vmatpush2.msra.mxu0 0.0
        %616 = vmatprep.subr.mxu0 0.0
        %617 = vmatpush2.msra.mxu0 0.0
        %618 = vmatprep.subr.mxu0 0.0
        %619 = vmatpush2.msra.mxu0 0.0
        %620 = vmatprep.subr.mxu0 0.0
        %621 = vmatpush2.msra.mxu0 0.0
        %622 = vmatprep.subr.mxu0 0.0
        %623 = vmatpush2.msra.mxu0 0.0
        %624 = vmatprep.subr.mxu0 0.0
        %625 = vmatpush2.msra.mxu0 0.0
        %626 = vmatprep.subr.mxu0 0.0
        %627 = vmatpush2.msra.mxu0 0.0
        %628 = vmatprep.subr.mxu0 0.0
        %629 = vmatpush2.msra.mxu0 0.0
        %630 = vmatprep.mubr.f32.mxu0 0.0
        %631 = vmatmul.mubr.f32.gmra.mxu0 %v564
        %v632 = vpop.f32.mrf.mxu0
        %v633 = vadd.f32 %v560, %v632
        %v634 = vpop.f32.mrf.mxu0
        %635 = vdwg.mxu0
        %v636 = vmax.f32 %v633, 0.0
        %v637 = vld [vmem:[%s3] sm:$0xff]
        %v638 = vld [vmem:[%s4] sm:$0x1]
        %v640 = vlaneseq
        %v641 = vshrl.u32 %v640, 7
        %v642 = vsub.s32 0, %v641
        %v643 = vrot.slane %v638, %v642
        %vm645 = vcmask 64512
        %v647 = vsel %vm645, %v636, 0
        %649 = vmatprep.subr.mxu0 0.0
        %650 = vmatpush1.msra.mxu0 0.0
        %651 = vmatprep.subr.mxu0 0.0
        %652 = vmatpush1.msra.mxu0 0.0
        %653 = vmatprep.subr.mxu0 0.0
        %654 = vmatpush1.msra.mxu0 0.0
        %655 = vmatprep.subr.mxu0 0.0
        %656 = vmatpush1.msra.mxu0 0.0
        %657 = vmatprep.subr.mxu0 0.0
        %658 = vmatpush1.msra.mxu0 0.0
        %659 = vmatprep.subr.mxu0 0.0
        %660 = vmatpush1.msra.mxu0 0.0
        %661 = vmatprep.subr.mxu0 0.0
        %662 = vmatpush1.msra.mxu0 0.0
        %663 = vmatprep.subr.mxu0 0.0
        %664 = vmatpush1.msra.mxu0 0.0
        %665 = vmatprep.subr.mxu0 0.0
        %666 = vmatpush1.msra.mxu0 0.0
        %667 = vmatprep.subr.mxu0 0.0
        %668 = vmatpush1.msra.mxu0 0.0
        %669 = vmatprep.subr.mxu0 0.0
        %670 = vmatpush1.msra.mxu0 0.0
        %671 = vmatprep.subr.mxu0 0.0
        %672 = vmatpush1.msra.mxu0 0.0
        %673 = vmatprep.subr.mxu0 0.0
        %674 = vmatpush1.msra.mxu0 0.0
        %675 = vmatprep.subr.mxu0 0.0
        %676 = vmatpush1.msra.mxu0 0.0
        %677 = vmatprep.subr.mxu0 0.0
        %678 = vmatpush1.msra.mxu0 0.0
        %679 = vmatprep.subr.mxu0 0.0
        %680 = vmatpush1.msra.mxu0 %v637
        %681 = vmatprep.subr.mxu0 0.0
        %682 = vmatpush2.msra.mxu0 0.0
        %683 = vmatprep.subr.mxu0 0.0
        %684 = vmatpush2.msra.mxu0 0.0
        %685 = vmatprep.subr.mxu0 0.0
        %686 = vmatpush2.msra.mxu0 0.0
        %687 = vmatprep.subr.mxu0 0.0
        %688 = vmatpush2.msra.mxu0 0.0
        %689 = vmatprep.subr.mxu0 0.0
        %690 = vmatpush2.msra.mxu0 0.0
        %691 = vmatprep.subr.mxu0 0.0
        %692 = vmatpush2.msra.mxu0 0.0
        %693 = vmatprep.subr.mxu0 0.0
        %694 = vmatpush2.msra.mxu0 0.0
        %695 = vmatprep.subr.mxu0 0.0
        %696 = vmatpush2.msra.mxu0 0.0
        %697 = vmatprep.subr.mxu0 0.0
        %698 = vmatpush2.msra.mxu0 0.0
        %699 = vmatprep.subr.mxu0 0.0
        %700 = vmatpush2.msra.mxu0 0.0
        %701 = vmatprep.subr.mxu0 0.0
        %702 = vmatpush2.msra.mxu0 0.0
        %703 = vmatprep.subr.mxu0 0.0
        %704 = vmatpush2.msra.mxu0 0.0
        %705 = vmatprep.subr.mxu0 0.0
        %706 = vmatpush2.msra.mxu0 0.0
        %707 = vmatprep.subr.mxu0 0.0
        %708 = vmatpush2.msra.mxu0 0.0
        %709 = vmatprep.subr.mxu0 0.0
        %710 = vmatpush2.msra.mxu0 0.0
        %711 = vmatprep.subr.mxu0 0.0
        %712 = vmatpush2.msra.mxu0 0.0
        %713 = vmatprep.mubr.f32.mxu0 0.0
        %714 = vmatmul.mubr.f32.gmra.mxu0 %v647
        %v715 = vpop.f32.mrf.mxu0
        %v716 = vadd.f32 %v643, %v715
        %v717 = vpop.f32.mrf.mxu0
        %718 = vdwg.mxu0
        %v720 = vrot.slane %v716, 4
        %v722 = vadd.f32 %v716, %v720
        %v723 = vxor.u32 %v722, 2147483648
        %v724 = vmul.f32 %v723, 1.442695
        %v725 = vpow.pop %v724
        %v726 = vadd.f32 %v725, 1.0
        %v727 = vrcp.pop %v726
        %v728 = vmul.f32 1.0, %v727
        %v729 = vlaneseq
        %v730 = vshrl.u32 %v729, 7
        %v731 = vsub.s32 0, %v730
        %v732 = vrot.slane %v728, %v731
        %734 = vbcast.lane.b32.xlu0 %v732, 256
        %v735 = vpop.permute.xlu0 %734
        %s737 = sor.u32 256, 8
        %738 = vbcast.lane.b32.xlu0 %v732, %s737
        %v739 = vpop.permute.xlu0 %738
        %s741 = sor.u32 256, 16
        %742 = vbcast.lane.b32.xlu0 %v732, %s741
        %v743 = vpop.permute.xlu0 %742
        %s745 = sor.u32 256, 24
        %746 = vbcast.lane.b32.xlu0 %v732, %s745
        %v747 = vpop.permute.xlu0 %746
        %v748 = vlaneseq
        %v749 = vshrl.u32 %v748, 7
        %v750 = vsub.s32 1, %v749
        %v751 = vrot.slane %v728, %v750
        %753 = vbcast.lane.b32.xlu0 %v751, 256
        %v754 = vpop.permute.xlu0 %753
        %s756 = sor.u32 256, 8
        %757 = vbcast.lane.b32.xlu0 %v751, %s756
        %v758 = vpop.permute.xlu0 %757
        %s760 = sor.u32 256, 16
        %761 = vbcast.lane.b32.xlu0 %v751, %s760
        %v762 = vpop.permute.xlu0 %761
        %s764 = sor.u32 256, 24
        %765 = vbcast.lane.b32.xlu0 %v751, %s764
        %v766 = vpop.permute.xlu0 %765
        %v767 = vlaneseq
        %v768 = vshrl.u32 %v767, 7
        %v769 = vsub.s32 2, %v768
        %v770 = vrot.slane %v728, %v769
        %772 = vbcast.lane.b32.xlu0 %v770, 256
        %v773 = vpop.permute.xlu0 %772
        %s775 = sor.u32 256, 8
        %776 = vbcast.lane.b32.xlu0 %v770, %s775
        %v777 = vpop.permute.xlu0 %776
        %s779 = sor.u32 256, 16
        %780 = vbcast.lane.b32.xlu0 %v770, %s779
        %v781 = vpop.permute.xlu0 %780
        %s783 = sor.u32 256, 24
        %784 = vbcast.lane.b32.xlu0 %v770, %s783
        %v785 = vpop.permute.xlu0 %784
        %v786 = vlaneseq
        %v787 = vshrl.u32 %v786, 7
        %v788 = vsub.s32 3, %v787
        %v789 = vrot.slane %v728, %v788
        %791 = vbcast.lane.b32.xlu0 %v789, 256
        %v792 = vpop.permute.xlu0 %791
        %s794 = sor.u32 256, 8
        %795 = vbcast.lane.b32.xlu0 %v789, %s794
        %v796 = vpop.permute.xlu0 %795
        %s798 = sor.u32 256, 16
        %799 = vbcast.lane.b32.xlu0 %v789, %s798
        %v800 = vpop.permute.xlu0 %799
        %s802 = sor.u32 256, 24
        %803 = vbcast.lane.b32.xlu0 %v789, %s802
        %v804 = vpop.permute.xlu0 %803
        %v805 = vmul.f32 %v246, %v735
        %v806 = vmul.f32 %v247, %v739
        %v807 = vmul.f32 %v248, %v743
        %v808 = vmul.f32 %v249, %v747
        %v809 = vmul.f32 %v250, %v754
        %v810 = vmul.f32 %v251, %v758
        %v811 = vmul.f32 %v252, %v762
        %v812 = vmul.f32 %v253, %v766
        %v813 = vmul.f32 %v254, %v773
        %v814 = vmul.f32 %v255, %v777
        %v815 = vmul.f32 %v256, %v781
        %v816 = vmul.f32 %v257, %v785
        %v817 = vmul.f32 %v258, %v792
        %v818 = vmul.f32 %v259, %v796
        %v819 = vmul.f32 %v260, %v800
        %v820 = vmul.f32 %v261, %v804
        %821 = vst [vmem:[%s243] sm:$0xff] %v805
        %822 = vst [vmem:[%s243 + $0x8] sm:$0xff] %v806
        %823 = vst [vmem:[%s243 + $0x10] sm:$0xff] %v807
        %824 = vst [vmem:[%s243 + $0x18] sm:$0xff] %v808
        %825 = vst [vmem:[%s243 + $0x20] sm:$0xff] %v809
        %826 = vst [vmem:[%s243 + $0x28] sm:$0xff] %v810
        %827 = vst [vmem:[%s243 + $0x30] sm:$0xff] %v811
        %828 = vst [vmem:[%s243 + $0x38] sm:$0xff] %v812
        %829 = vst [vmem:[%s243 + $0x40] sm:$0xff] %v813
        %830 = vst [vmem:[%s243 + $0x48] sm:$0xff] %v814
        %831 = vst [vmem:[%s243 + $0x50] sm:$0xff] %v815
        %832 = vst [vmem:[%s243 + $0x58] sm:$0xff] %v816
        %833 = vst [vmem:[%s243 + $0x60] sm:$0xff] %v817
        %834 = vst [vmem:[%s243 + $0x68] sm:$0xff] %v818
        %835 = vst [vmem:[%s243 + $0x70] sm:$0xff] %v819
        %836 = vst [vmem:[%s243 + $0x78] sm:$0xff] %v820
        %s837 = sand.u32 %s140, 1
        %s838 = scalar_lea.sflag [#allocation4], %s837
        %s839 = sand.u32 %s140, 1
        %s840 = smul.addr %s839, 128
        %s841 = scalar_lea.vmem [#allocation5], %s840
        // Predicated region
        $region45: #{tpu_custom_call.1} parent=39 // pred_check
          %p842 = pneg %p150
        $region46: #{tpu_custom_call.1} parent=39 // pred_check_branch
          %844 = sbr.rel (%p842) target = $region48
        $region47: #{tpu_custom_call.1} parent=39 // pred_region
          %s845 = smul.u32 4, %s22
          %s847 = ssub.s32 2048, 2048
          %848 = vsyncadd %s838, %s847
          %s849 = smul.addr %s845, 4
          %s850 = smul.addr %s849, 128
          %s851 = scalar_lea.hbm %s5, %s850
          %s852 = sshll.u32 %s841, 4
          %s853 = int_to_ptr.vmem [resolvable:$true] %s852
          %858 = dma.vmem_to_hbm [thread:$0]  %s853, 2048, %s851, %s838, 128, 128, 8
        $region48: #{tpu_custom_call.1} parent=39 // pred_fallthru
          _
      $region40: #{tpu_custom_call.1} parent=5 // pred_fallthru
        _
      %p859 = scmp.le.s32.totalorder 2, %s17
      // Predicated region
      $region49: #{tpu_custom_call.1} parent=5 // pred_check
        %p860 = pneg %p859
      $region50: #{tpu_custom_call.1} parent=5 // pred_check_branch
        %862 = sbr.rel (%p860) target = $region52
      $region51: #{tpu_custom_call.1} parent=5 // pred_region
        %s863 = ssub.s32 %s17, 2
        // Predicated region
        $region53: #{tpu_custom_call.1} parent=51 // pred_check
          %p864 = pneg %p156
        $region54: #{tpu_custom_call.1} parent=51 // pred_check_branch
          %866 = sbr.rel (%p864) target = $region56
        $region55: #{tpu_custom_call.1} parent=51 // pred_region
          %s867 = sand.u32 %s141, 1
          %s868 = scalar_lea.sflag [#allocation4], %s867
          %s869 = sand.u32 %s141, 1
          %s870 = smul.addr %s869, 128
          %s871 = scalar_lea.vmem [#allocation5], %s870
          %872 = dma.done %s868, 2048
        $region56: #{tpu_custom_call.1} parent=51 // pred_fallthru
          _
      $region52: #{tpu_custom_call.1} parent=5 // pred_fallthru
        _
    $region6: #{tpu_custom_call.1} parent=1 // loop_footer
      %s21 = sadd.s32 1, %s17
    $region7: #{tpu_custom_call.1} parent=1 // loop_footer_branch
      %16 = sbr.rel target = $region3
    $region8: #{tpu_custom_call.1} parent=1 // loop_exit
      _
    %873 = vsyncpa [#allocation3], 1
    %s874 = scalar_lea.sflag [#allocation3], 1
    %875 = vsyncpa %s874, 1
    %876 = vsyncpa [#allocation4], 1
    %s877 = scalar_lea.sflag [#allocation4], 1
    %878 = vsyncpa %s877, 1

</llo_original>
